<compile_context>
chip_gen: v6e
topology: v6e:2x2x1
jax: 0.10.0
libtpu: 0.0.40
codegen_flags: <defaults>
</compile_context>

<pallas_src>
import functools

import jax
import jax.numpy as jnp
from jax.experimental import pallas as pl
from jax.experimental.pallas import tpu as pltpu


_LANE = 128
_SUBLANE_F32 = 8
_VMEM_LIMIT = 48 << 20   # headroom below v7x's 64 MiB/TC; above v5e/v6e default scoped


def _round_up(x, m):
    return (x + m - 1) // m * m


def _pad_last(x, target):
    pad = target - x.shape[-1]
    if pad == 0:
        return x
    return jnp.pad(x, [(0, 0)] * (x.ndim - 1) + [(0, pad)])


def _pad_2d(x, rows, cols):
    return jnp.pad(x, ((0, rows - x.shape[0]), (0, cols - x.shape[1])))


# ----------------------------------------------------------------------------
# Fused kernel: fc1 (+ text modality sum), fc2, out — one VMEM-resident chain.
# ----------------------------------------------------------------------------
def _fused_mlp_kernel(pic_ref, text_ref, w1_ref, b1_ref, w2_ref, b2_ref,
                      w3_ref, b3_ref, o_ref):
    # fc1 on the already-pooled pic features.  bf16 cast happens here in VMEM
    # (HBM only sees one f32 read, no separate XLA cast pass).  bf16 MXU
    # operands with f32 accumulation; elementwise adds stay f32 (v5e VPU).
    pic = pic_ref[...].astype(jnp.bfloat16)
    h = jnp.dot(pic, w1_ref[...], preferred_element_type=jnp.float32)
    # modality sum + bias in a single fused f32 VPU pass
    h = h + (text_ref[...] + b1_ref[...])
    # fc2
    h = jnp.dot(h.astype(jnp.bfloat16), w2_ref[...],
                preferred_element_type=jnp.float32) + b2_ref[...]
    # out
    o_ref[...] = jnp.dot(h.astype(jnp.bfloat16), w3_ref[...],
                         preferred_element_type=jnp.float32) + b3_ref[...]


def _fused_call(pic_pooled, text_pad, p, *, block_b=None):
    B, Kp = pic_pooled.shape
    hp = p["w1"].shape[1]
    n2p = p["w2"].shape[1]
    ocp = p["w3"].shape[1]

    cost = pl.CostEstimate(
        flops=2 * B * (Kp * hp + hp * n2p + n2p * ocp),
        transcendentals=0,
        bytes_accessed=(pic_pooled.size * 4 + text_pad.size * 4
                        + (p["w1"].size + p["w2"].size + p["w3"].size) * 2
                        + (p["b1"].size + p["b2"].size + p["b3"].size) * 4
                        + B * ocp * 4),
    )
    args = (pic_pooled, text_pad, p["w1"], p["b1"], p["w2"], p["b2"],
            p["w3"], p["b3"])

    if block_b is None or block_b >= B:
        # Whole problem fits VMEM: single launch, full-array blocks, no grid.
        return pl.pallas_call(
            _fused_mlp_kernel,
            out_shape=jax.ShapeDtypeStruct((B, ocp), jnp.float32),
            compiler_params=pltpu.CompilerParams(vmem_limit_bytes=_VMEM_LIMIT),
            cost_estimate=cost,
        )(*args)

    # Batch-tiled path for large-B deployments.  "parallel" batch axis lets
    # Mosaic shard grid steps across TensorCores (v7x has 2 TCs).
    assert B % block_b == 0, "wrapper must pad the batch to a multiple of block_b"
    assert block_b % _SUBLANE_F32 == 0, "block_b must be a multiple of 8 (f32 sublanes)"

    # Weights/biases never change block index -> keep them resident in VMEM
    # once (no per-step double-buffering) via un-blocked VMEM specs.
    resident = pl.BlockSpec(memory_space=pltpu.MemorySpace.VMEM)

    return pl.pallas_call(
        _fused_mlp_kernel,
        out_shape=jax.ShapeDtypeStruct((B, ocp), jnp.float32),
        grid=(B // block_b,),
        in_specs=[pl.BlockSpec((block_b, Kp), lambda i: (i, 0)),
                  pl.BlockSpec((block_b, hp), lambda i: (i, 0)),
                  resident, resident,     # w1, b1
                  resident, resident,     # w2, b2
                  resident, resident],    # w3, b3
        out_specs=pl.BlockSpec((block_b, ocp), lambda i: (i, 0)),
        compiler_params=pltpu.CompilerParams(
            dimension_semantics=("parallel",),
            vmem_limit_bytes=_VMEM_LIMIT),
        cost_estimate=cost,
    )(*args)


# ----------------------------------------------------------------------------
# One-time weight preparation: keep the ORIGINAL fc1 weights, pad lanes to 128.
# ----------------------------------------------------------------------------
def prepare_params(params, pic_shape):
    _, C, H, W = pic_shape
    Ho, Wo = H // 4, W // 4
    F_in, hidden = params["w1"].shape
    assert F_in == C * Ho * Wo, (F_in, C, Ho, Wo)
    n2 = params["w2"].shape[1]
    oc = params["w3"].shape[1]

    Kp = _round_up(F_in, _LANE)
    hp = _round_up(hidden, _LANE)
    n2p = _round_up(n2, _LANE)
    ocp = _round_up(oc, _LANE)

    return {
        # Zero row/column padding keeps every padded lane exactly zero through
        # the whole chain, so slicing at the end is exact.
        "w1": _pad_2d(params["w1"].astype(jnp.float32), Kp, hp).astype(jnp.bfloat16),
        "b1": _pad_last(params["b1"].astype(jnp.float32).reshape(1, hidden), hp),
        "w2": _pad_2d(params["w2"].astype(jnp.float32), hp, n2p).astype(jnp.bfloat16),
        "b2": _pad_last(params["b2"].astype(jnp.float32).reshape(1, n2), n2p),
        "w3": _pad_2d(params["w3"].astype(jnp.float32), n2p, ocp).astype(jnp.bfloat16),
        "b3": _pad_last(params["b3"].astype(jnp.float32).reshape(1, oc), ocp),
    }


@functools.partial(jax.jit, static_argnames=("out_class", "block_b"))
def multimodal_sum_forward(pic_features, text_emb, prepared, *,
                           out_class, block_b=None):
    # TODO(synk): pic_model (CNN backbone) and BertModel are external
    # pretrained submodules; their outputs are provided as inputs here.
    B, C, H, W = pic_features.shape
    assert H % 4 == 0 and W % 4 == 0
    Kp = prepared["w1"].shape[0]
    hp = prepared["w1"].shape[1]

    # F.avg_pool2d(pic, 4): one up-front 16x reduction (XLA reduce) so the fc1
    # GEMM streams the original (C*49, hidden_pad) w1, not a 16x-expanded fold.
    Ho, Wo = H // 4, W // 4
    pooled = pic_features.astype(jnp.float32).reshape(B, C, Ho, 4, Wo, 4).mean(axis=(3, 5))
    pic_flat = pooled.reshape(B, C * Ho * Wo)
    pic_flat = _pad_last(pic_flat, Kp)                  # lane-dense K
    text_pad = _pad_last(text_emb.astype(jnp.float32), hp)

    # Pad the batch to full f32 sublane groups (or to block_b) so every
    # vld/vst is unmasked; slice the real rows back afterwards.
    bm = block_b if (block_b is not None and block_b < B) else _SUBLANE_F32
    Bp = _round_up(B, bm)
    if Bp != B:
        rpad = ((0, Bp - B), (0, 0))
        pic_flat = jnp.pad(pic_flat, rpad)
        text_pad = jnp.pad(text_pad, rpad)

    out_pad = _fused_call(pic_flat, text_pad, prepared, block_b=block_b)
    return out_pad[:B, :out_class]


def reference_forward(pic_features, text_emb, params):
    B, C, H, W = pic_features.shape
    pooled = pic_features.reshape(B, C, H // 4, 4, W // 4, 4).mean(axis=(3, 5))
    flat = pooled.reshape(B, -1)
    h = flat @ params["w1"] + params["b1"] + text_emb
    h = h @ params["w2"] + params["b2"]
    return h @ params["w3"] + params["b3"]


if __name__ == "__main__":
    # Small synthetic shapes consistent with the module (scaled-down backbone):
    # pic_model output (B, C, 28, 28) -> avg_pool(4) -> (B, C, 7, 7) -> fc1.
    C, H, W = 16, 28, 28
    hidden, fc2_out, out_class = 32, 250, 4
    F_in = C * (H // 4) * (W // 4)                      # fc1 in_features

    key = jax.random.PRNGKey(0)
    ks = jax.random.split(key, 12)

    params = {
        "w1": jax.random.normal(ks[0], (F_in, hidden), jnp.float32) / jnp.sqrt(F_in),
        "b1": jax.random.normal(ks[1], (1, hidden), jnp.float32) * 0.1,
        "w2": jax.random.normal(ks[2], (hidden, fc2_out), jnp.float32) / jnp.sqrt(hidden),
        "b2": jax.random.normal(ks[3], (1, fc2_out), jnp.float32) * 0.1,
        "w3": jax.random.normal(ks[4], (fc2_out, out_class), jnp.float32) / jnp.sqrt(fc2_out),
        "b3": jax.random.normal(ks[5], (1, out_class), jnp.float32) * 0.1,
    }
    prepared = prepare_params(params, (1, C, H, W))      # one-time weight pad

    # --- Test 1: small batch, single-block (no-grid) path --------------------
    B = 2
    pic = jax.random.normal(ks[6], (B, C, H, W), jnp.float32)
    text = jax.random.normal(ks[7], (B, hidden), jnp.float32)
    out = multimodal_sum_forward(pic, text, prepared, out_class=out_class)
    out = jax.block_until_ready(out)
    ref = reference_forward(pic, text, params)
    assert out.shape == (B, out_class), out.shape
    assert jnp.allclose(out, ref, rtol=2e-2, atol=2e-2), (out, ref)

    # --- Test 2: batch-tiled "parallel" grid path (resident weights) ---------
    B2, block_b = 16, 8
    pic2 = jax.random.normal(ks[8], (B2, C, H, W), jnp.float32)
    text2 = jax.random.normal(ks[9], (B2, hidden), jnp.float32)
    out2 = multimodal_sum_forward(pic2, text2, prepared,
                                  out_class=out_class, block_b=block_b)
    out2 = jax.block_until_ready(out2)
    ref2 = reference_forward(pic2, text2, params)
    assert out2.shape == (B2, out_class), out2.shape
    assert jnp.allclose(out2, ref2, rtol=2e-2, atol=2e-2), (out2, ref2)

    print("KERNEL_OK")
</pallas_src>

<mosaic_0001>
module attributes {stable_mosaic.version = 11 : i64} {
  func.func @_fused_mlp_kernel(%arg0: memref<8x896xf32, #tpu.memory_space<vmem>>, %arg1: memref<8x128xf32, #tpu.memory_space<vmem>>, %arg2: memref<896x128xbf16, #tpu.memory_space<vmem>>, %arg3: memref<1x128xf32, #tpu.memory_space<vmem>>, %arg4: memref<128x256xbf16, #tpu.memory_space<vmem>>, %arg5: memref<1x256xf32, #tpu.memory_space<vmem>>, %arg6: memref<256x128xbf16, #tpu.memory_space<vmem>>, %arg7: memref<1x128xf32, #tpu.memory_space<vmem>>, %arg8: memref<8x128xf32, #tpu.memory_space<vmem>>) attributes {dimension_semantics = [], scalar_prefetch = 0 : i64, scratch_operands = 0 : i64, tpu.core_type = #tpu.core_type<tc>} {
    %c0 = arith.constant 0 : index
    %c0_0 = arith.constant 0 : index
    %0 = vector.load %arg0[%c0, %c0_0] : memref<8x896xf32, #tpu.memory_space<vmem>>, vector<8x896xf32>
    %1 = arith.truncf %0 : vector<8x896xf32> to vector<8x896xbf16>
    %c0_1 = arith.constant 0 : index
    %c0_2 = arith.constant 0 : index
    %2 = vector.load %arg2[%c0_1, %c0_2] : memref<896x128xbf16, #tpu.memory_space<vmem>>, vector<896x128xbf16>
    %cst = arith.constant dense<0.000000e+00> : vector<8x128xf32>
    %3 = tpu.matmul %1, %2, %cst {dimension_numbers = #tpu.dot_dimension_numbers<[1], [0], [0], [1], [0, 0, 1, 1], [], []>} : vector<8x896xbf16>, vector<896x128xbf16>, vector<8x128xf32> -> vector<8x128xf32>
    %c0_3 = arith.constant 0 : index
    %c0_4 = arith.constant 0 : index
    %4 = vector.load %arg1[%c0_3, %c0_4] : memref<8x128xf32, #tpu.memory_space<vmem>>, vector<8x128xf32>
    %c0_5 = arith.constant 0 : index
    %c0_6 = arith.constant 0 : index
    %5 = vector.load %arg3[%c0_5, %c0_6] : memref<1x128xf32, #tpu.memory_space<vmem>>, vector<1x128xf32>
    %6 = vector.broadcast %5 : vector<1x128xf32> to vector<8x128xf32>
    %7 = arith.addf %4, %6 : vector<8x128xf32>
    %8 = arith.addf %3, %7 : vector<8x128xf32>
    %9 = arith.truncf %8 : vector<8x128xf32> to vector<8x128xbf16>
    %c0_7 = arith.constant 0 : index
    %c0_8 = arith.constant 0 : index
    %10 = vector.load %arg4[%c0_7, %c0_8] : memref<128x256xbf16, #tpu.memory_space<vmem>>, vector<128x256xbf16>
    %cst_9 = arith.constant dense<0.000000e+00> : vector<8x256xf32>
    %11 = tpu.matmul %9, %10, %cst_9 {dimension_numbers = #tpu.dot_dimension_numbers<[1], [0], [0], [1], [0, 0, 1, 1], [], []>} : vector<8x128xbf16>, vector<128x256xbf16>, vector<8x256xf32> -> vector<8x256xf32>
    %c0_10 = arith.constant 0 : index
    %c0_11 = arith.constant 0 : index
    %12 = vector.load %arg5[%c0_10, %c0_11] : memref<1x256xf32, #tpu.memory_space<vmem>>, vector<1x256xf32>
    %13 = vector.broadcast %12 : vector<1x256xf32> to vector<8x256xf32>
    %14 = arith.addf %11, %13 : vector<8x256xf32>
    %15 = arith.truncf %14 : vector<8x256xf32> to vector<8x256xbf16>
    %c0_12 = arith.constant 0 : index
    %c0_13 = arith.constant 0 : index
    %16 = vector.load %arg6[%c0_12, %c0_13] : memref<256x128xbf16, #tpu.memory_space<vmem>>, vector<256x128xbf16>
    %cst_14 = arith.constant dense<0.000000e+00> : vector<8x128xf32>
    %17 = tpu.matmul %15, %16, %cst_14 {dimension_numbers = #tpu.dot_dimension_numbers<[1], [0], [0], [1], [0, 0, 1, 1], [], []>} : vector<8x256xbf16>, vector<256x128xbf16>, vector<8x128xf32> -> vector<8x128xf32>
    %c0_15 = arith.constant 0 : index
    %c0_16 = arith.constant 0 : index
    %18 = vector.load %arg7[%c0_15, %c0_16] : memref<1x128xf32, #tpu.memory_space<vmem>>, vector<1x128xf32>
    %19 = vector.broadcast %18 : vector<1x128xf32> to vector<8x128xf32>
    %20 = arith.addf %17, %19 : vector<8x128xf32>
    %c0_17 = arith.constant 0 : index
    %c0_18 = arith.constant 0 : index
    %21 = vector.load %arg8[%c0_17, %c0_18] : memref<8x128xf32, #tpu.memory_space<vmem>>, vector<8x128xf32>
    tpu.vector_store %arg8[%c0_17, %c0_18], %20 {strides = array<i32>} : memref<8x128xf32, #tpu.memory_space<vmem>>, vector<8x128xf32>,
    return
  }
}

</mosaic_0001>

<llo_original>
// kernel: multimodal_sum_forward.1
$region0: #{multimodal_sum_forward.1}
  #allocation0 [shape = 'u32[]', space=smem, size = 0x4, offset = 0x4, fixed_abs, tag = 'smem constant byte address 0x4 - core index']
  #allocation1 [shape = 'u32[144,128]{1,0:T(1,128)}', space=vmem, size = 0x12000, scoped, tag = 'internal scratch']
  %s0 = inlined_call_operand.vmem [shape: f32[8,896], index: 0, kind: input, shape index: {}]
  %s1 = inlined_call_operand.vmem [shape: f32[8,128], index: 1, kind: input, shape index: {}]
  %s2 = inlined_call_operand.vmem [shape: bf16[896,128], index: 2, kind: input, shape index: {}]
  %s3 = inlined_call_operand.vmem [shape: f32[1,128], index: 3, kind: input, shape index: {}]
  %s4 = inlined_call_operand.vmem [shape: bf16[128,256], index: 4, kind: input, shape index: {}]
  %s5 = inlined_call_operand.vmem [shape: f32[1,256], index: 5, kind: input, shape index: {}]
  %s6 = inlined_call_operand.vmem [shape: bf16[256,128], index: 6, kind: input, shape index: {}]
  %s7 = inlined_call_operand.vmem [shape: f32[1,128], index: 7, kind: input, shape index: {}]
  %s8 = inlined_call_operand.vmem [shape: f32[8,128], index: 8, kind: output, shape index: {}]
  %s9 = sld [smem:[#allocation0]]
  $region42: #{multimodal_sum_forward.1} parent=0
    _
  %s11 = ssub.s32 1, %s9
  %s12 = scalar_select 0, %s11, %s9
  // Predicated region
  $region2: #{multimodal_sum_forward.1} parent=0 // pred_check
    _
  $region3: #{multimodal_sum_forward.1} parent=0 // pred_check_branch
    %14 = sbr.rel (0) target = $region5
  $region4: #{multimodal_sum_forward.1} parent=0 // pred_region
    _
  $region5: #{multimodal_sum_forward.1} parent=0 // pred_fallthru
    _
  // Predicated region
  $region6: #{multimodal_sum_forward.1} parent=0 // pred_check
    _
  $region7: #{multimodal_sum_forward.1} parent=0 // pred_check_branch
    %16 = sbr.rel (0) target = $region9
  $region8: #{multimodal_sum_forward.1} parent=0 // pred_region
    _
  $region9: #{multimodal_sum_forward.1} parent=0 // pred_fallthru
    _
  // Predicated region
  $region10: #{multimodal_sum_forward.1} parent=0 // pred_check
    _
  $region11: #{multimodal_sum_forward.1} parent=0 // pred_check_branch
    %18 = sbr.rel (0) target = $region13
  $region12: #{multimodal_sum_forward.1} parent=0 // pred_region
    _
  $region13: #{multimodal_sum_forward.1} parent=0 // pred_fallthru
    _
  // Predicated region
  $region14: #{multimodal_sum_forward.1} parent=0 // pred_check
    _
  $region15: #{multimodal_sum_forward.1} parent=0 // pred_check_branch
    %20 = sbr.rel (0) target = $region17
  $region16: #{multimodal_sum_forward.1} parent=0 // pred_region
    _
  $region17: #{multimodal_sum_forward.1} parent=0 // pred_fallthru
    _
  // Predicated region
  $region18: #{multimodal_sum_forward.1} parent=0 // pred_check
    _
  $region19: #{multimodal_sum_forward.1} parent=0 // pred_check_branch
    %22 = sbr.rel (0) target = $region21
  $region20: #{multimodal_sum_forward.1} parent=0 // pred_region
    _
  $region21: #{multimodal_sum_forward.1} parent=0 // pred_fallthru
    _
  // Predicated region
  $region22: #{multimodal_sum_forward.1} parent=0 // pred_check
    _
  $region23: #{multimodal_sum_forward.1} parent=0 // pred_check_branch
    %24 = sbr.rel (0) target = $region25
  $region24: #{multimodal_sum_forward.1} parent=0 // pred_region
    _
  $region25: #{multimodal_sum_forward.1} parent=0 // pred_fallthru
    _
  // Predicated region
  $region26: #{multimodal_sum_forward.1} parent=0 // pred_check
    _
  $region27: #{multimodal_sum_forward.1} parent=0 // pred_check_branch
    %26 = sbr.rel (0) target = $region29
  $region28: #{multimodal_sum_forward.1} parent=0 // pred_region
    _
  $region29: #{multimodal_sum_forward.1} parent=0 // pred_fallthru
    _
  // Predicated region
  $region30: #{multimodal_sum_forward.1} parent=0 // pred_check
    _
  $region31: #{multimodal_sum_forward.1} parent=0 // pred_check_branch
    %28 = sbr.rel (0) target = $region33
  $region32: #{multimodal_sum_forward.1} parent=0 // pred_region
    _
  $region33: #{multimodal_sum_forward.1} parent=0 // pred_fallthru
    _
  %v30 = vld [vmem:[%s0] sm:$0xff]
  %v31 = vld [vmem:[%s0 + $0x8] sm:$0xff]
  %v32 = vld [vmem:[%s0 + $0x10] sm:$0xff]
  %v33 = vld [vmem:[%s0 + $0x18] sm:$0xff]
  %v34 = vld [vmem:[%s0 + $0x20] sm:$0xff]
  %v35 = vld [vmem:[%s0 + $0x28] sm:$0xff]
  %v36 = vld [vmem:[%s0 + $0x30] sm:$0xff]
  %v37 = vpack.c.bf16 %v30, %v30
  %v38 = vpack.c.bf16 %v31, %v31
  %v39 = vpack.c.bf16 %v32, %v32
  %v40 = vpack.c.bf16 %v33, %v33
  %v41 = vpack.c.bf16 %v34, %v34
  %v42 = vpack.c.bf16 %v35, %v35
  %v43 = vpack.c.bf16 %v36, %v36
  %v44 = vld [vmem:[%s2] sm:$0xf]
  %v45 = vld [vmem:[%s2 + $0x4] sm:$0xf]
  %v46 = vld [vmem:[%s2 + $0x8] sm:$0xf]
  %v47 = vld [vmem:[%s2 + $0xc] sm:$0xf]
  %v48 = vld [vmem:[%s2 + $0x10] sm:$0xf]
  %v49 = vld [vmem:[%s2 + $0x14] sm:$0xf]
  %v50 = vld [vmem:[%s2 + $0x18] sm:$0xf]
  %v51 = vld [vmem:[%s2 + $0x1c] sm:$0xf]
  %v52 = vld [vmem:[%s2 + $0x20] sm:$0xf]
  %v53 = vld [vmem:[%s2 + $0x24] sm:$0xf]
  %v54 = vld [vmem:[%s2 + $0x28] sm:$0xf]
  %v55 = vld [vmem:[%s2 + $0x2c] sm:$0xf]
  %v56 = vld [vmem:[%s2 + $0x30] sm:$0xf]
  %v57 = vld [vmem:[%s2 + $0x34] sm:$0xf]
  %v58 = vld [vmem:[%s2 + $0x38] sm:$0xf]
  %v59 = vld [vmem:[%s2 + $0x3c] sm:$0xf]
  %v60 = vld [vmem:[%s2 + $0x40] sm:$0xf]
  %v61 = vld [vmem:[%s2 + $0x44] sm:$0xf]
  %v62 = vld [vmem:[%s2 + $0x48] sm:$0xf]
  %v63 = vld [vmem:[%s2 + $0x4c] sm:$0xf]
  %v64 = vld [vmem:[%s2 + $0x50] sm:$0xf]
  %v65 = vld [vmem:[%s2 + $0x54] sm:$0xf]
  %v66 = vld [vmem:[%s2 + $0x58] sm:$0xf]
  %v67 = vld [vmem:[%s2 + $0x5c] sm:$0xf]
  %v68 = vld [vmem:[%s2 + $0x60] sm:$0xf]
  %v69 = vld [vmem:[%s2 + $0x64] sm:$0xf]
  %v70 = vld [vmem:[%s2 + $0x68] sm:$0xf]
  %v71 = vld [vmem:[%s2 + $0x6c] sm:$0xf]
  %v72 = vld [vmem:[%s2 + $0x70] sm:$0xf]
  %v73 = vld [vmem:[%s2 + $0x74] sm:$0xf]
  %v74 = vld [vmem:[%s2 + $0x78] sm:$0xf]
  %v75 = vld [vmem:[%s2 + $0x7c] sm:$0xf]
  %v76 = vld [vmem:[%s2 + $0x80] sm:$0xf]
  %v77 = vld [vmem:[%s2 + $0x84] sm:$0xf]
  %v78 = vld [vmem:[%s2 + $0x88] sm:$0xf]
  %v79 = vld [vmem:[%s2 + $0x8c] sm:$0xf]
  %v80 = vld [vmem:[%s2 + $0x90] sm:$0xf]
  %v81 = vld [vmem:[%s2 + $0x94] sm:$0xf]
  %v82 = vld [vmem:[%s2 + $0x98] sm:$0xf]
  %v83 = vld [vmem:[%s2 + $0x9c] sm:$0xf]
  %v84 = vld [vmem:[%s2 + $0xa0] sm:$0xf]
  %v85 = vld [vmem:[%s2 + $0xa4] sm:$0xf]
  %v86 = vld [vmem:[%s2 + $0xa8] sm:$0xf]
  %v87 = vld [vmem:[%s2 + $0xac] sm:$0xf]
  %v88 = vld [vmem:[%s2 + $0xb0] sm:$0xf]
  %v89 = vld [vmem:[%s2 + $0xb4] sm:$0xf]
  %v90 = vld [vmem:[%s2 + $0xb8] sm:$0xf]
  %v91 = vld [vmem:[%s2 + $0xbc] sm:$0xf]
  %v92 = vld [vmem:[%s2 + $0xc0] sm:$0xf]
  %v93 = vld [vmem:[%s2 + $0xc4] sm:$0xf]
  %v94 = vld [vmem:[%s2 + $0xc8] sm:$0xf]
  %v95 = vld [vmem:[%s2 + $0xcc] sm:$0xf]
  %v96 = vld [vmem:[%s2 + $0xd0] sm:$0xf]
  %v97 = vld [vmem:[%s2 + $0xd4] sm:$0xf]
  %v98 = vld [vmem:[%s2 + $0xd8] sm:$0xf]
  %v99 = vld [vmem:[%s2 + $0xdc] sm:$0xf]
  %v100 = vld [vmem:[%s2 + $0xe0] sm:$0xf]
  %v101 = vld [vmem:[%s2 + $0xe4] sm:$0xf]
  %v102 = vld [vmem:[%s2 + $0xe8] sm:$0xf]
  %v103 = vld [vmem:[%s2 + $0xec] sm:$0xf]
  %v104 = vld [vmem:[%s2 + $0xf0] sm:$0xf]
  %v105 = vld [vmem:[%s2 + $0xf4] sm:$0xf]
  %v106 = vld [vmem:[%s2 + $0xf8] sm:$0xf]
  %v107 = vld [vmem:[%s2 + $0xfc] sm:$0xf]
  %v108 = vld [vmem:[%s2 + $0x100] sm:$0xf]
  %v109 = vld [vmem:[%s2 + $0x104] sm:$0xf]
  %v110 = vld [vmem:[%s2 + $0x108] sm:$0xf]
  %v111 = vld [vmem:[%s2 + $0x10c] sm:$0xf]
  %v112 = vld [vmem:[%s2 + $0x110] sm:$0xf]
  %v113 = vld [vmem:[%s2 + $0x114] sm:$0xf]
  %v114 = vld [vmem:[%s2 + $0x118] sm:$0xf]
  %v115 = vld [vmem:[%s2 + $0x11c] sm:$0xf]
  %v116 = vld [vmem:[%s2 + $0x120] sm:$0xf]
  %v117 = vld [vmem:[%s2 + $0x124] sm:$0xf]
  %v118 = vld [vmem:[%s2 + $0x128] sm:$0xf]
  %v119 = vld [vmem:[%s2 + $0x12c] sm:$0xf]
  %v120 = vld [vmem:[%s2 + $0x130] sm:$0xf]
  %v121 = vld [vmem:[%s2 + $0x134] sm:$0xf]
  %v122 = vld [vmem:[%s2 + $0x138] sm:$0xf]
  %v123 = vld [vmem:[%s2 + $0x13c] sm:$0xf]
  %v124 = vld [vmem:[%s2 + $0x140] sm:$0xf]
  %v125 = vld [vmem:[%s2 + $0x144] sm:$0xf]
  %v126 = vld [vmem:[%s2 + $0x148] sm:$0xf]
  %v127 = vld [vmem:[%s2 + $0x14c] sm:$0xf]
  %v128 = vld [vmem:[%s2 + $0x150] sm:$0xf]
  %v129 = vld [vmem:[%s2 + $0x154] sm:$0xf]
  %v130 = vld [vmem:[%s2 + $0x158] sm:$0xf]
  %v131 = vld [vmem:[%s2 + $0x15c] sm:$0xf]
  %v132 = vld [vmem:[%s2 + $0x160] sm:$0xf]
  %v133 = vld [vmem:[%s2 + $0x164] sm:$0xf]
  %v134 = vld [vmem:[%s2 + $0x168] sm:$0xf]
  %v135 = vld [vmem:[%s2 + $0x16c] sm:$0xf]
  %v136 = vld [vmem:[%s2 + $0x170] sm:$0xf]
  %v137 = vld [vmem:[%s2 + $0x174] sm:$0xf]
  %v138 = vld [vmem:[%s2 + $0x178] sm:$0xf]
  %v139 = vld [vmem:[%s2 + $0x17c] sm:$0xf]
  %v140 = vld [vmem:[%s2 + $0x180] sm:$0xf]
  %v141 = vld [vmem:[%s2 + $0x184] sm:$0xf]
  %v142 = vld [vmem:[%s2 + $0x188] sm:$0xf]
  %v143 = vld [vmem:[%s2 + $0x18c] sm:$0xf]
  %v144 = vld [vmem:[%s2 + $0x190] sm:$0xf]
  %v145 = vld [vmem:[%s2 + $0x194] sm:$0xf]
  %v146 = vld [vmem:[%s2 + $0x198] sm:$0xf]
  %v147 = vld [vmem:[%s2 + $0x19c] sm:$0xf]
  %v148 = vld [vmem:[%s2 + $0x1a0] sm:$0xf]
  %v149 = vld [vmem:[%s2 + $0x1a4] sm:$0xf]
  %v150 = vld [vmem:[%s2 + $0x1a8] sm:$0xf]
  %v151 = vld [vmem:[%s2 + $0x1ac] sm:$0xf]
  %v152 = vld [vmem:[%s2 + $0x1b0] sm:$0xf]
  %v153 = vld [vmem:[%s2 + $0x1b4] sm:$0xf]
  %v154 = vld [vmem:[%s2 + $0x1b8] sm:$0xf]
  %v155 = vld [vmem:[%s2 + $0x1bc] sm:$0xf]
  %v156 = vld [vmem:[%s1] sm:$0xff]
  %v157 = vld [vmem:[%s3] sm:$0x1]
  %v159 = vlaneseq
  %v160 = vshrl.u32 %v159, 7
  %v161 = vsub.s32 0, %v160
  %v162 = vrot.slane %v157, %v161
  %v164 = vadd.f32 %v156, %v162
  %v277 = vunpack.c.l.b16 %v44
  %v278 = vunpack.c.l.b16 %v45
  %v279 = vunpack.c.l.b16 %v46
  %v280 = vunpack.c.l.b16 %v47
  %v281 = vunpack.c.l.b16 %v48
  %v282 = vunpack.c.l.b16 %v49
  %v283 = vunpack.c.l.b16 %v50
  %v284 = vunpack.c.l.b16 %v51
  %v285 = vunpack.c.l.b16 %v52
  %v286 = vunpack.c.l.b16 %v53
  %v287 = vunpack.c.l.b16 %v54
  %v288 = vunpack.c.l.b16 %v55
  %v289 = vunpack.c.l.b16 %v56
  %v290 = vunpack.c.l.b16 %v57
  %v291 = vunpack.c.l.b16 %v58
  %v292 = vunpack.c.l.b16 %v59
  %v293 = vunpack.c.l.b16 %v60
  %v294 = vunpack.c.l.b16 %v61
  %v295 = vunpack.c.l.b16 %v62
  %v296 = vunpack.c.l.b16 %v63
  %v297 = vunpack.c.l.b16 %v64
  %v298 = vunpack.c.l.b16 %v65
  %v299 = vunpack.c.l.b16 %v66
  %v300 = vunpack.c.l.b16 %v67
  %v301 = vunpack.c.l.b16 %v68
  %v302 = vunpack.c.l.b16 %v69
  %v303 = vunpack.c.l.b16 %v70
  %v304 = vunpack.c.l.b16 %v71
  %v305 = vunpack.c.l.b16 %v72
  %v306 = vunpack.c.l.b16 %v73
  %v307 = vunpack.c.l.b16 %v74
  %v308 = vunpack.c.l.b16 %v75
  %v309 = vunpack.c.l.b16 %v76
  %v310 = vunpack.c.l.b16 %v77
  %v311 = vunpack.c.l.b16 %v78
  %v312 = vunpack.c.l.b16 %v79
  %v313 = vunpack.c.l.b16 %v80
  %v314 = vunpack.c.l.b16 %v81
  %v315 = vunpack.c.l.b16 %v82
  %v316 = vunpack.c.l.b16 %v83
  %v317 = vunpack.c.l.b16 %v84
  %v318 = vunpack.c.l.b16 %v85
  %v319 = vunpack.c.l.b16 %v86
  %v320 = vunpack.c.l.b16 %v87
  %v321 = vunpack.c.l.b16 %v88
  %v322 = vunpack.c.l.b16 %v89
  %v323 = vunpack.c.l.b16 %v90
  %v324 = vunpack.c.l.b16 %v91
  %v325 = vunpack.c.l.b16 %v92
  %v326 = vunpack.c.l.b16 %v93
  %v327 = vunpack.c.l.b16 %v94
  %v328 = vunpack.c.l.b16 %v95
  %v329 = vunpack.c.l.b16 %v96
  %v330 = vunpack.c.l.b16 %v97
  %v331 = vunpack.c.l.b16 %v98
  %v332 = vunpack.c.l.b16 %v99
  %v333 = vunpack.c.l.b16 %v100
  %v334 = vunpack.c.l.b16 %v101
  %v335 = vunpack.c.l.b16 %v102
  %v336 = vunpack.c.l.b16 %v103
  %v337 = vunpack.c.l.b16 %v104
  %v338 = vunpack.c.l.b16 %v105
  %v339 = vunpack.c.l.b16 %v106
  %v340 = vunpack.c.l.b16 %v107
  %v341 = vunpack.c.l.b16 %v108
  %v342 = vunpack.c.l.b16 %v109
  %v343 = vunpack.c.l.b16 %v110
  %v344 = vunpack.c.l.b16 %v111
  %v345 = vunpack.c.l.b16 %v112
  %v346 = vunpack.c.l.b16 %v113
  %v347 = vunpack.c.l.b16 %v114
  %v348 = vunpack.c.l.b16 %v115
  %v349 = vunpack.c.l.b16 %v116
  %v350 = vunpack.c.l.b16 %v117
  %v351 = vunpack.c.l.b16 %v118
  %v352 = vunpack.c.l.b16 %v119
  %v353 = vunpack.c.l.b16 %v120
  %v354 = vunpack.c.l.b16 %v121
  %v355 = vunpack.c.l.b16 %v122
  %v356 = vunpack.c.l.b16 %v123
  %v357 = vunpack.c.l.b16 %v124
  %v358 = vunpack.c.l.b16 %v125
  %v359 = vunpack.c.l.b16 %v126
  %v360 = vunpack.c.l.b16 %v127
  %v361 = vunpack.c.l.b16 %v128
  %v362 = vunpack.c.l.b16 %v129
  %v363 = vunpack.c.l.b16 %v130
  %v364 = vunpack.c.l.b16 %v131
  %v365 = vunpack.c.l.b16 %v132
  %v366 = vunpack.c.l.b16 %v133
  %v367 = vunpack.c.l.b16 %v134
  %v368 = vunpack.c.l.b16 %v135
  %v369 = vunpack.c.l.b16 %v136
  %v370 = vunpack.c.l.b16 %v137
  %v371 = vunpack.c.l.b16 %v138
  %v372 = vunpack.c.l.b16 %v139
  %v373 = vunpack.c.l.b16 %v140
  %v374 = vunpack.c.l.b16 %v141
  %v375 = vunpack.c.l.b16 %v142
  %v376 = vunpack.c.l.b16 %v143
  %v377 = vunpack.c.l.b16 %v144
  %v378 = vunpack.c.l.b16 %v145
  %v379 = vunpack.c.l.b16 %v146
  %v380 = vunpack.c.l.b16 %v147
  %v381 = vunpack.c.l.b16 %v148
  %v382 = vunpack.c.l.b16 %v149
  %v383 = vunpack.c.l.b16 %v150
  %v384 = vunpack.c.l.b16 %v151
  %v385 = vunpack.c.l.b16 %v152
  %v386 = vunpack.c.l.b16 %v153
  %v387 = vunpack.c.l.b16 %v154
  %v388 = vunpack.c.l.b16 %v155
  %v389 = vpack.c.b16 %v278, %v277
  %v390 = vpack.c.b16 %v280, %v279
  %v391 = vpack.c.b16 %v282, %v281
  %v392 = vpack.c.b16 %v284, %v283
  %v393 = vpack.c.b16 %v286, %v285
  %v394 = vpack.c.b16 %v288, %v287
  %v395 = vpack.c.b16 %v290, %v289
  %v396 = vpack.c.b16 %v292, %v291
  %v397 = vpack.c.b16 %v294, %v293
  %v398 = vpack.c.b16 %v296, %v295
  %v399 = vpack.c.b16 %v298, %v297
  %v400 = vpack.c.b16 %v300, %v299
  %v401 = vpack.c.b16 %v302, %v301
  %v402 = vpack.c.b16 %v304, %v303
  %v403 = vpack.c.b16 %v306, %v305
  %v404 = vpack.c.b16 %v308, %v307
  %v405 = vpack.c.b16 %v310, %v309
  %v406 = vpack.c.b16 %v312, %v311
  %v407 = vpack.c.b16 %v314, %v313
  %v408 = vpack.c.b16 %v316, %v315
  %v409 = vpack.c.b16 %v318, %v317
  %v410 = vpack.c.b16 %v320, %v319
  %v411 = vpack.c.b16 %v322, %v321
  %v412 = vpack.c.b16 %v324, %v323
  %v413 = vpack.c.b16 %v326, %v325
  %v414 = vpack.c.b16 %v328, %v327
  %v415 = vpack.c.b16 %v330, %v329
  %v416 = vpack.c.b16 %v332, %v331
  %v417 = vpack.c.b16 %v334, %v333
  %v418 = vpack.c.b16 %v336, %v335
  %v419 = vpack.c.b16 %v338, %v337
  %v420 = vpack.c.b16 %v340, %v339
  %v421 = vpack.c.b16 %v342, %v341
  %v422 = vpack.c.b16 %v344, %v343
  %v423 = vpack.c.b16 %v346, %v345
  %v424 = vpack.c.b16 %v348, %v347
  %v425 = vpack.c.b16 %v350, %v349
  %v426 = vpack.c.b16 %v352, %v351
  %v427 = vpack.c.b16 %v354, %v353
  %v428 = vpack.c.b16 %v356, %v355
  %v429 = vpack.c.b16 %v358, %v357
  %v430 = vpack.c.b16 %v360, %v359
  %v431 = vpack.c.b16 %v362, %v361
  %v432 = vpack.c.b16 %v364, %v363
  %v433 = vpack.c.b16 %v366, %v365
  %v434 = vpack.c.b16 %v368, %v367
  %v435 = vpack.c.b16 %v370, %v369
  %v436 = vpack.c.b16 %v372, %v371
  %v437 = vpack.c.b16 %v374, %v373
  %v438 = vpack.c.b16 %v376, %v375
  %v439 = vpack.c.b16 %v378, %v377
  %v440 = vpack.c.b16 %v380, %v379
  %v441 = vpack.c.b16 %v382, %v381
  %v442 = vpack.c.b16 %v384, %v383
  %v443 = vpack.c.b16 %v386, %v385
  %v444 = vpack.c.b16 %v388, %v387
  %501 = vmatprep.subr.bf16.mxu0 0
  %502 = vmatpush1.bf16.msra.mxu0 %v396
  %503 = vmatprep.subr.bf16.mxu0 0
  %504 = vmatpush1.bf16.msra.mxu0 %v395
  %505 = vmatprep.subr.bf16.mxu0 0
  %506 = vmatpush1.bf16.msra.mxu0 %v394
  %507 = vmatprep.subr.bf16.mxu0 0
  %508 = vmatpush1.bf16.msra.mxu0 %v393
  %509 = vmatprep.subr.bf16.mxu0 0
  %510 = vmatpush1.bf16.msra.mxu0 %v392
  %511 = vmatprep.subr.bf16.mxu0 0
  %512 = vmatpush1.bf16.msra.mxu0 %v391
  %513 = vmatprep.subr.bf16.mxu0 0
  %514 = vmatpush1.bf16.msra.mxu0 %v390
  %515 = vmatprep.subr.bf16.mxu0 0
  %516 = vmatpush1.bf16.msra.mxu0 %v389
  %517 = vmatprep.subr.bf16.mxu0 0
  %518 = vmatpush2.bf16.msra.mxu0 %v404
  %519 = vmatprep.subr.bf16.mxu0 0
  %520 = vmatpush2.bf16.msra.mxu0 %v403
  %521 = vmatprep.subr.bf16.mxu0 0
  %522 = vmatpush2.bf16.msra.mxu0 %v402
  %523 = vmatprep.subr.bf16.mxu0 0
  %524 = vmatpush2.bf16.msra.mxu0 %v401
  %525 = vmatprep.subr.bf16.mxu0 0
  %526 = vmatpush2.bf16.msra.mxu0 %v400
  %527 = vmatprep.subr.bf16.mxu0 0
  %528 = vmatpush2.bf16.msra.mxu0 %v399
  %529 = vmatprep.subr.bf16.mxu0 0
  %530 = vmatpush2.bf16.msra.mxu0 %v398
  %531 = vmatprep.subr.bf16.mxu0 0
  %532 = vmatpush2.bf16.msra.mxu0 %v397
  %533 = vmatprep.mubr.bf16.mxu0 %v38
  %534 = vmatmul.mubr.bf16.gmra.mxu0 %v37
  %v535 = vpop.f32.mrf.mxu0
  %v536 = vadd.f32 %v164, %v535
  %v537 = vpop.f32.mrf.mxu0
  %v538 = vpop.f32.mrf.mxu0
  %v539 = vpop.f32.mrf.mxu0
  %540 = vdwg.mxu0
  %541 = vmatprep.subr.bf16.mxu0 0
  %542 = vmatpush1.bf16.msra.mxu0 %v412
  %543 = vmatprep.subr.bf16.mxu0 0
  %544 = vmatpush1.bf16.msra.mxu0 %v411
  %545 = vmatprep.subr.bf16.mxu0 0
  %546 = vmatpush1.bf16.msra.mxu0 %v410
  %547 = vmatprep.subr.bf16.mxu0 0
  %548 = vmatpush1.bf16.msra.mxu0 %v409
  %549 = vmatprep.subr.bf16.mxu0 0
  %550 = vmatpush1.bf16.msra.mxu0 %v408
  %551 = vmatprep.subr.bf16.mxu0 0
  %552 = vmatpush1.bf16.msra.mxu0 %v407
  %553 = vmatprep.subr.bf16.mxu0 0
  %554 = vmatpush1.bf16.msra.mxu0 %v406
  %555 = vmatprep.subr.bf16.mxu0 0
  %556 = vmatpush1.bf16.msra.mxu0 %v405
  %557 = vmatprep.subr.bf16.mxu0 0
  %558 = vmatpush2.bf16.msra.mxu0 %v420
  %559 = vmatprep.subr.bf16.mxu0 0
  %560 = vmatpush2.bf16.msra.mxu0 %v419
  %561 = vmatprep.subr.bf16.mxu0 0
  %562 = vmatpush2.bf16.msra.mxu0 %v418
  %563 = vmatprep.subr.bf16.mxu0 0
  %564 = vmatpush2.bf16.msra.mxu0 %v417
  %565 = vmatprep.subr.bf16.mxu0 0
  %566 = vmatpush2.bf16.msra.mxu0 %v416
  %567 = vmatprep.subr.bf16.mxu0 0
  %568 = vmatpush2.bf16.msra.mxu0 %v415
  %569 = vmatprep.subr.bf16.mxu0 0
  %570 = vmatpush2.bf16.msra.mxu0 %v414
  %571 = vmatprep.subr.bf16.mxu0 0
  %572 = vmatpush2.bf16.msra.mxu0 %v413
  %573 = vmatprep.mubr.bf16.mxu0 %v40
  %574 = vmatmul.mubr.bf16.gmra.mxu0 %v39
  %v575 = vpop.f32.mrf.mxu0
  %v576 = vadd.f32 %v536, %v575
  %v577 = vpop.f32.mrf.mxu0
  %v578 = vpop.f32.mrf.mxu0
  %v579 = vpop.f32.mrf.mxu0
  %580 = vdwg.mxu0
  %581 = vmatprep.subr.bf16.mxu0 0
  %582 = vmatpush1.bf16.msra.mxu0 %v428
  %583 = vmatprep.subr.bf16.mxu0 0
  %584 = vmatpush1.bf16.msra.mxu0 %v427
  %585 = vmatprep.subr.bf16.mxu0 0
  %586 = vmatpush1.bf16.msra.mxu0 %v426
  %587 = vmatprep.subr.bf16.mxu0 0
  %588 = vmatpush1.bf16.msra.mxu0 %v425
  %589 = vmatprep.subr.bf16.mxu0 0
  %590 = vmatpush1.bf16.msra.mxu0 %v424
  %591 = vmatprep.subr.bf16.mxu0 0
  %592 = vmatpush1.bf16.msra.mxu0 %v423
  %593 = vmatprep.subr.bf16.mxu0 0
  %594 = vmatpush1.bf16.msra.mxu0 %v422
  %595 = vmatprep.subr.bf16.mxu0 0
  %596 = vmatpush1.bf16.msra.mxu0 %v421
  %597 = vmatprep.subr.bf16.mxu0 0
  %598 = vmatpush2.bf16.msra.mxu0 %v436
  %599 = vmatprep.subr.bf16.mxu0 0
  %600 = vmatpush2.bf16.msra.mxu0 %v435
  %601 = vmatprep.subr.bf16.mxu0 0
  %602 = vmatpush2.bf16.msra.mxu0 %v434
  %603 = vmatprep.subr.bf16.mxu0 0
  %604 = vmatpush2.bf16.msra.mxu0 %v433
  %605 = vmatprep.subr.bf16.mxu0 0
  %606 = vmatpush2.bf16.msra.mxu0 %v432
  %607 = vmatprep.subr.bf16.mxu0 0
  %608 = vmatpush2.bf16.msra.mxu0 %v431
  %609 = vmatprep.subr.bf16.mxu0 0
  %610 = vmatpush2.bf16.msra.mxu0 %v430
  %611 = vmatprep.subr.bf16.mxu0 0
  %612 = vmatpush2.bf16.msra.mxu0 %v429
  %613 = vmatprep.mubr.bf16.mxu0 %v42
  %614 = vmatmul.mubr.bf16.gmra.mxu0 %v41
  %v615 = vpop.f32.mrf.mxu0
  %v616 = vadd.f32 %v576, %v615
  %v617 = vpop.f32.mrf.mxu0
  %v618 = vpop.f32.mrf.mxu0
  %v619 = vpop.f32.mrf.mxu0
  %620 = vdwg.mxu0
  %621 = vmatprep.subr.bf16.mxu0 0
  %622 = vmatpush1.bf16.msra.mxu0 %v444
  %623 = vmatprep.subr.bf16.mxu0 0
  %624 = vmatpush1.bf16.msra.mxu0 %v443
  %625 = vmatprep.subr.bf16.mxu0 0
  %626 = vmatpush1.bf16.msra.mxu0 %v442
  %627 = vmatprep.subr.bf16.mxu0 0
  %628 = vmatpush1.bf16.msra.mxu0 %v441
  %629 = vmatprep.subr.bf16.mxu0 0
  %630 = vmatpush1.bf16.msra.mxu0 %v440
  %631 = vmatprep.subr.bf16.mxu0 0
  %632 = vmatpush1.bf16.msra.mxu0 %v439
  %633 = vmatprep.subr.bf16.mxu0 0
  %634 = vmatpush1.bf16.msra.mxu0 %v438
  %635 = vmatprep.subr.bf16.mxu0 0
  %636 = vmatpush1.bf16.msra.mxu0 %v437
  %637 = vmatprep.subr.bf16.mxu0 0
  %638 = vmatpush2.bf16.msra.mxu0 0
  %639 = vmatprep.subr.bf16.mxu0 0
  %640 = vmatpush2.bf16.msra.mxu0 0
  %641 = vmatprep.subr.bf16.mxu0 0
  %642 = vmatpush2.bf16.msra.mxu0 0
  %643 = vmatprep.subr.bf16.mxu0 0
  %644 = vmatpush2.bf16.msra.mxu0 0
  %645 = vmatprep.subr.bf16.mxu0 0
  %646 = vmatpush2.bf16.msra.mxu0 0
  %647 = vmatprep.subr.bf16.mxu0 0
  %648 = vmatpush2.bf16.msra.mxu0 0
  %649 = vmatprep.subr.bf16.mxu0 0
  %650 = vmatpush2.bf16.msra.mxu0 0
  %651 = vmatprep.subr.bf16.mxu0 0
  %652 = vmatpush2.bf16.msra.mxu0 0
  %653 = vmatprep.mubr.bf16.mxu0 0
  %654 = vmatmul.mubr.bf16.gmra.mxu0 %v43
  %v655 = vpop.f32.mrf.mxu0
  %v656 = vadd.f32 %v616, %v655
  %v657 = vpop.f32.mrf.mxu0
  %v658 = vpop.f32.mrf.mxu0
  %v659 = vpop.f32.mrf.mxu0
  %660 = vdwg.mxu0
  %v661 = vpack.c.bf16 %v656, %v656
  %v662 = vld [vmem:[%s4] sm:$0xff]
  %v663 = vld [vmem:[%s4 + $0x8] sm:$0xff]
  %v664 = vld [vmem:[%s4 + $0x10] sm:$0xff]
  %v665 = vld [vmem:[%s4 + $0x18] sm:$0xff]
  %v666 = vld [vmem:[%s4 + $0x20] sm:$0xff]
  %v667 = vld [vmem:[%s4 + $0x28] sm:$0xff]
  %v668 = vld [vmem:[%s4 + $0x30] sm:$0xff]
  %v669 = vld [vmem:[%s4 + $0x38] sm:$0xff]
  %v670 = vld [vmem:[%s4 + $0x40] sm:$0xff]
  %v671 = vld [vmem:[%s4 + $0x48] sm:$0xff]
  %v672 = vld [vmem:[%s4 + $0x50] sm:$0xff]
  %v673 = vld [vmem:[%s4 + $0x58] sm:$0xff]
  %v674 = vld [vmem:[%s4 + $0x60] sm:$0xff]
  %v675 = vld [vmem:[%s4 + $0x68] sm:$0xff]
  %v676 = vld [vmem:[%s4 + $0x70] sm:$0xff]
  %v677 = vld [vmem:[%s4 + $0x78] sm:$0xff]
  %v678 = vld [vmem:[%s5] sm:$0x3]
  %v680 = vlaneseq
  %v681 = vshrl.u32 %v680, 7
  %v682 = vsub.s32 0, %v681
  %v683 = vrot.slane %v678, %v682
  %v684 = vlaneseq
  %v685 = vshrl.u32 %v684, 7
  %v686 = vsub.s32 1, %v685
  %v687 = vrot.slane %v678, %v686
  %v706 = vunpack.c.l.b16 %v662
  %v707 = vunpack.c.h.b16 %v662
  %v708 = vunpack.c.l.b16 %v663
  %v709 = vunpack.c.h.b16 %v663
  %v710 = vunpack.c.l.b16 %v664
  %v711 = vunpack.c.h.b16 %v664
  %v712 = vunpack.c.l.b16 %v665
  %v713 = vunpack.c.h.b16 %v665
  %v714 = vunpack.c.l.b16 %v666
  %v715 = vunpack.c.h.b16 %v666
  %v716 = vunpack.c.l.b16 %v667
  %v717 = vunpack.c.h.b16 %v667
  %v718 = vunpack.c.l.b16 %v668
  %v719 = vunpack.c.h.b16 %v668
  %v720 = vunpack.c.l.b16 %v669
  %v721 = vunpack.c.h.b16 %v669
  %v722 = vunpack.c.l.b16 %v670
  %v723 = vunpack.c.h.b16 %v670
  %v724 = vunpack.c.l.b16 %v671
  %v725 = vunpack.c.h.b16 %v671
  %v726 = vunpack.c.l.b16 %v672
  %v727 = vunpack.c.h.b16 %v672
  %v728 = vunpack.c.l.b16 %v673
  %v729 = vunpack.c.h.b16 %v673
  %v730 = vunpack.c.l.b16 %v674
  %v731 = vunpack.c.h.b16 %v674
  %v732 = vunpack.c.l.b16 %v675
  %v733 = vunpack.c.h.b16 %v675
  %v734 = vunpack.c.l.b16 %v676
  %v735 = vunpack.c.h.b16 %v676
  %v736 = vunpack.c.l.b16 %v677
  %v737 = vunpack.c.h.b16 %v677
  %v738 = vpack.c.b16 %v708, %v706
  %v739 = vpack.c.b16 %v709, %v707
  %v740 = vpack.c.b16 %v712, %v710
  %v741 = vpack.c.b16 %v713, %v711
  %v742 = vpack.c.b16 %v716, %v714
  %v743 = vpack.c.b16 %v717, %v715
  %v744 = vpack.c.b16 %v720, %v718
  %v745 = vpack.c.b16 %v721, %v719
  %v746 = vpack.c.b16 %v724, %v722
  %v747 = vpack.c.b16 %v725, %v723
  %v748 = vpack.c.b16 %v728, %v726
  %v749 = vpack.c.b16 %v729, %v727
  %v750 = vpack.c.b16 %v732, %v730
  %v751 = vpack.c.b16 %v733, %v731
  %v752 = vpack.c.b16 %v736, %v734
  %v753 = vpack.c.b16 %v737, %v735
  %770 = vmatprep.subr.bf16.mxu0 %v753
  %771 = vmatpush1.bf16.msra.mxu0 %v752
  %772 = vmatprep.subr.bf16.mxu0 %v751
  %773 = vmatpush1.bf16.msra.mxu0 %v750
  %774 = vmatprep.subr.bf16.mxu0 %v749
  %775 = vmatpush1.bf16.msra.mxu0 %v748
  %776 = vmatprep.subr.bf16.mxu0 %v747
  %777 = vmatpush1.bf16.msra.mxu0 %v746
  %778 = vmatprep.subr.bf16.mxu0 %v745
  %779 = vmatpush1.bf16.msra.mxu0 %v744
  %780 = vmatprep.subr.bf16.mxu0 %v743
  %781 = vmatpush1.bf16.msra.mxu0 %v742
  %782 = vmatprep.subr.bf16.mxu0 %v741
  %783 = vmatpush1.bf16.msra.mxu0 %v740
  %784 = vmatprep.subr.bf16.mxu0 %v739
  %785 = vmatpush1.bf16.msra.mxu0 %v738
  %786 = vmatprep.subr.bf16.mxu0 0
  %787 = vmatpush2.bf16.msra.mxu0 0
  %788 = vmatprep.subr.bf16.mxu0 0
  %789 = vmatpush2.bf16.msra.mxu0 0
  %790 = vmatprep.subr.bf16.mxu0 0
  %791 = vmatpush2.bf16.msra.mxu0 0
  %792 = vmatprep.subr.bf16.mxu0 0
  %793 = vmatpush2.bf16.msra.mxu0 0
  %794 = vmatprep.subr.bf16.mxu0 0
  %795 = vmatpush2.bf16.msra.mxu0 0
  %796 = vmatprep.subr.bf16.mxu0 0
  %797 = vmatpush2.bf16.msra.mxu0 0
  %798 = vmatprep.subr.bf16.mxu0 0
  %799 = vmatpush2.bf16.msra.mxu0 0
  %800 = vmatprep.subr.bf16.mxu0 0
  %801 = vmatpush2.bf16.msra.mxu0 0
  %802 = vmatprep.mubr.bf16.mxu0 0
  %803 = vmatmul.mubr.bf16.gmra.mxu0 %v661
  %v804 = vpop.f32.mrf.mxu0
  %v805 = vadd.f32 %v683, %v804
  %v806 = vpop.f32.mrf.mxu0
  %v807 = vadd.f32 %v687, %v806
  %v808 = vpop.f32.mrf.mxu0
  %v809 = vpop.f32.mrf.mxu0
  %810 = vdwg.mxu0
  %v811 = vpack.c.bf16 %v805, %v805
  %v812 = vpack.c.bf16 %v807, %v807
  %v813 = vld [vmem:[%s6] sm:$0xf]
  %v814 = vld [vmem:[%s6 + $0x4] sm:$0xf]
  %v815 = vld [vmem:[%s6 + $0x8] sm:$0xf]
  %v816 = vld [vmem:[%s6 + $0xc] sm:$0xf]
  %v817 = vld [vmem:[%s6 + $0x10] sm:$0xf]
  %v818 = vld [vmem:[%s6 + $0x14] sm:$0xf]
  %v819 = vld [vmem:[%s6 + $0x18] sm:$0xf]
  %v820 = vld [vmem:[%s6 + $0x1c] sm:$0xf]
  %v821 = vld [vmem:[%s6 + $0x20] sm:$0xf]
  %v822 = vld [vmem:[%s6 + $0x24] sm:$0xf]
  %v823 = vld [vmem:[%s6 + $0x28] sm:$0xf]
  %v824 = vld [vmem:[%s6 + $0x2c] sm:$0xf]
  %v825 = vld [vmem:[%s6 + $0x30] sm:$0xf]
  %v826 = vld [vmem:[%s6 + $0x34] sm:$0xf]
  %v827 = vld [vmem:[%s6 + $0x38] sm:$0xf]
  %v828 = vld [vmem:[%s6 + $0x3c] sm:$0xf]
  %v829 = vld [vmem:[%s6 + $0x40] sm:$0xf]
  %v830 = vld [vmem:[%s6 + $0x44] sm:$0xf]
  %v831 = vld [vmem:[%s6 + $0x48] sm:$0xf]
  %v832 = vld [vmem:[%s6 + $0x4c] sm:$0xf]
  %v833 = vld [vmem:[%s6 + $0x50] sm:$0xf]
  %v834 = vld [vmem:[%s6 + $0x54] sm:$0xf]
  %v835 = vld [vmem:[%s6 + $0x58] sm:$0xf]
  %v836 = vld [vmem:[%s6 + $0x5c] sm:$0xf]
  %v837 = vld [vmem:[%s6 + $0x60] sm:$0xf]
  %v838 = vld [vmem:[%s6 + $0x64] sm:$0xf]
  %v839 = vld [vmem:[%s6 + $0x68] sm:$0xf]
  %v840 = vld [vmem:[%s6 + $0x6c] sm:$0xf]
  %v841 = vld [vmem:[%s6 + $0x70] sm:$0xf]
  %v842 = vld [vmem:[%s6 + $0x74] sm:$0xf]
  %v843 = vld [vmem:[%s6 + $0x78] sm:$0xf]
  %v844 = vld [vmem:[%s6 + $0x7c] sm:$0xf]
  %v845 = vld [vmem:[%s7] sm:$0x1]
  %v847 = vlaneseq
  %v848 = vshrl.u32 %v847, 7
  %v849 = vsub.s32 0, %v848
  %v850 = vrot.slane %v845, %v849
  %v884 = vunpack.c.l.b16 %v813
  %v885 = vunpack.c.l.b16 %v814
  %v886 = vunpack.c.l.b16 %v815
  %v887 = vunpack.c.l.b16 %v816
  %v888 = vunpack.c.l.b16 %v817
  %v889 = vunpack.c.l.b16 %v818
  %v890 = vunpack.c.l.b16 %v819
  %v891 = vunpack.c.l.b16 %v820
  %v892 = vunpack.c.l.b16 %v821
  %v893 = vunpack.c.l.b16 %v822
  %v894 = vunpack.c.l.b16 %v823
  %v895 = vunpack.c.l.b16 %v824
  %v896 = vunpack.c.l.b16 %v825
  %v897 = vunpack.c.l.b16 %v826
  %v898 = vunpack.c.l.b16 %v827
  %v899 = vunpack.c.l.b16 %v828
  %v900 = vunpack.c.l.b16 %v829
  %v901 = vunpack.c.l.b16 %v830
  %v902 = vunpack.c.l.b16 %v831
  %v903 = vunpack.c.l.b16 %v832
  %v904 = vunpack.c.l.b16 %v833
  %v905 = vunpack.c.l.b16 %v834
  %v906 = vunpack.c.l.b16 %v835
  %v907 = vunpack.c.l.b16 %v836
  %v908 = vunpack.c.l.b16 %v837
  %v909 = vunpack.c.l.b16 %v838
  %v910 = vunpack.c.l.b16 %v839
  %v911 = vunpack.c.l.b16 %v840
  %v912 = vunpack.c.l.b16 %v841
  %v913 = vunpack.c.l.b16 %v842
  %v914 = vunpack.c.l.b16 %v843
  %v915 = vunpack.c.l.b16 %v844
  %v916 = vpack.c.b16 %v885, %v884
  %v917 = vpack.c.b16 %v887, %v886
  %v918 = vpack.c.b16 %v889, %v888
  %v919 = vpack.c.b16 %v891, %v890
  %v920 = vpack.c.b16 %v893, %v892
  %v921 = vpack.c.b16 %v895, %v894
  %v922 = vpack.c.b16 %v897, %v896
  %v923 = vpack.c.b16 %v899, %v898
  %v924 = vpack.c.b16 %v901, %v900
  %v925 = vpack.c.b16 %v903, %v902
  %v926 = vpack.c.b16 %v905, %v904
  %v927 = vpack.c.b16 %v907, %v906
  %v928 = vpack.c.b16 %v909, %v908
  %v929 = vpack.c.b16 %v911, %v910
  %v930 = vpack.c.b16 %v913, %v912
  %v931 = vpack.c.b16 %v915, %v914
  %948 = vmatprep.subr.bf16.mxu0 0
  %949 = vmatpush1.bf16.msra.mxu0 %v923
  %950 = vmatprep.subr.bf16.mxu0 0
  %951 = vmatpush1.bf16.msra.mxu0 %v922
  %952 = vmatprep.subr.bf16.mxu0 0
  %953 = vmatpush1.bf16.msra.mxu0 %v921
  %954 = vmatprep.subr.bf16.mxu0 0
  %955 = vmatpush1.bf16.msra.mxu0 %v920
  %956 = vmatprep.subr.bf16.mxu0 0
  %957 = vmatpush1.bf16.msra.mxu0 %v919
  %958 = vmatprep.subr.bf16.mxu0 0
  %959 = vmatpush1.bf16.msra.mxu0 %v918
  %960 = vmatprep.subr.bf16.mxu0 0
  %961 = vmatpush1.bf16.msra.mxu0 %v917
  %962 = vmatprep.subr.bf16.mxu0 0
  %963 = vmatpush1.bf16.msra.mxu0 %v916
  %964 = vmatprep.subr.bf16.mxu0 0
  %965 = vmatpush2.bf16.msra.mxu0 %v931
  %966 = vmatprep.subr.bf16.mxu0 0
  %967 = vmatpush2.bf16.msra.mxu0 %v930
  %968 = vmatprep.subr.bf16.mxu0 0
  %969 = vmatpush2.bf16.msra.mxu0 %v929
  %970 = vmatprep.subr.bf16.mxu0 0
  %971 = vmatpush2.bf16.msra.mxu0 %v928
  %972 = vmatprep.subr.bf16.mxu0 0
  %973 = vmatpush2.bf16.msra.mxu0 %v927
  %974 = vmatprep.subr.bf16.mxu0 0
  %975 = vmatpush2.bf16.msra.mxu0 %v926
  %976 = vmatprep.subr.bf16.mxu0 0
  %977 = vmatpush2.bf16.msra.mxu0 %v925
  %978 = vmatprep.subr.bf16.mxu0 0
  %979 = vmatpush2.bf16.msra.mxu0 %v924
  %980 = vmatprep.mubr.bf16.mxu0 %v812
  %981 = vmatmul.mubr.bf16.gmra.mxu0 %v811
  %v982 = vpop.f32.mrf.mxu0
  %v983 = vadd.f32 %v850, %v982
  %v984 = vpop.f32.mrf.mxu0
  %v985 = vpop.f32.mrf.mxu0
  %v986 = vpop.f32.mrf.mxu0
  %987 = vdwg.mxu0
  %988 = vst [vmem:[%s8] sm:$0xff] %v983
  // Predicated region
  $region34: #{multimodal_sum_forward.1} parent=0 // pred_check
    _
  $region35: #{multimodal_sum_forward.1} parent=0 // pred_check_branch
    %990 = sbr.rel (0) target = $region37
  $region36: #{multimodal_sum_forward.1} parent=0 // pred_region
    _
  $region37: #{multimodal_sum_forward.1} parent=0 // pred_fallthru
    _
  // Predicated region
  $region38: #{multimodal_sum_forward.1} parent=0 // pred_check
    _
  $region39: #{multimodal_sum_forward.1} parent=0 // pred_check_branch
    %992 = sbr.rel (0) target = $region41
  $region40: #{multimodal_sum_forward.1} parent=0 // pred_region
    _
  $region41: #{multimodal_sum_forward.1} parent=0 // pred_fallthru
    _

</llo_original>
